<compile_context>
chip_gen: v5e
topology: v5e:2x2
jax: 0.10.0
libtpu: 0.0.40
codegen_flags: <defaults>
</compile_context>

<pallas_src>
import jax
import jax.numpy as jnp
from jax.experimental import pallas as pl
from jax.experimental.pallas import tpu as pltpu


# --------------------------------------------------------------------------
# Kernel: elementwise select on dense [TB, C*H*W] tiles.
# --------------------------------------------------------------------------
def _prompter_kernel(x_ref, prompt_ref, mask_ref, o_ref):
    # x_ref / o_ref : (TB, CHW)     prompt_ref / mask_ref : (1, CHW)
    interior = mask_ref[...] != 0                       # (1, CHW) bool
    o_ref[...] = jnp.where(interior, x_ref[...], prompt_ref[...]).astype(
        o_ref.dtype)


# --------------------------------------------------------------------------
# Glue: assemble the full [1,3,image,image] prompt frame in plain JAX.
# --------------------------------------------------------------------------
def build_prompt(pad_left, pad_right, pad_up, pad_down, inner_size):
    zeros_inner = jnp.zeros((1, 3, inner_size, inner_size),
                            dtype=pad_left.dtype)
    middle = jnp.concatenate([pad_left, zeros_inner, pad_right], axis=3)
    prompt = jnp.concatenate([pad_up, middle, pad_down], axis=2)
    return prompt  # [1, 3, image_size, image_size]


# --------------------------------------------------------------------------
# Chip-aware tiling helpers.
# --------------------------------------------------------------------------
def _vmem_tile_budget_bytes():
    """Bytes to spend on the double-buffered x/out tiles."""
    cap = None
    try:
        cap = int(pltpu.get_tpu_info().vmem_capacity_bytes)
    except Exception:
        cap = None
    if not cap or cap <= 0:
        cap = 64 << 20          # conservative: v7x per-TensorCore VMEM
    # Leave ~half for the resident prompt/mask, pipeline slack and compiler
    # scratch; 48 MiB of tiles is already far past the HBM roofline knee.
    return max(8 << 20, min(cap // 2, 48 << 20))


def _pick_tile_batch(batch, bytes_per_image, sublane_mult, tile_budget_bytes):
    """Images per grid step.

    tb is either the full batch (always a legal block shape) or a multiple of
    `sublane_mult` (8 for f32, 16 for bf16) so the (sublane, lane) block dims
    satisfy the (8, 128) rule.  Ragged last block is fine.
    """
    # x tile + out tile, each double-buffered: 4 * tb * bytes_per_image
    tb = tile_budget_bytes // max(1, 4 * bytes_per_image)
    if tb >= batch:
        return batch
    tb = max(sublane_mult, (tb // sublane_mult) * sublane_mult)
    return min(tb, batch)


# --------------------------------------------------------------------------
# Wrapper.
# --------------------------------------------------------------------------
def random_performance_prompter(x, pad_left, pad_right, pad_up, pad_down,
                                *, pad_size):
    B, C, H, W = x.shape
    assert C == 3
    assert H == W, "RandomPerformancePrompter assumes square images"
    inner = H - 2 * pad_size
    assert inner > 0
    out_dtype = x.dtype
    itemsize = jnp.dtype(out_dtype).itemsize

    # Full-frame prompt, cast to the compute dtype so the in-kernel select
    # does not promote.
    prompt = build_prompt(pad_left, pad_right, pad_up, pad_down,
                          inner).astype(out_dtype)          # (1, C, H, W)

    # Precomputed interior mask (grid-invariant, stays resident in VMEM),
    # stored in x.dtype so it costs no extra resident footprint vs. prompt.
    row = jnp.arange(H)[:, None]
    col = jnp.arange(W)[None, :]
    interior = ((row >= pad_size) & (row < pad_size + inner) &
                (col >= pad_size) & (col < pad_size + inner))
    mask = jnp.broadcast_to(interior, (1, C, H, W)).astype(out_dtype)

    # Fully dense views: lane dim = C*H*W (multiple of 128 for 16^2 / 224^2),
    # sublane dim = batch tile -> no sublane padding, unmasked full-width vst.
    CHW = C * H * W
    x2 = x.reshape(B, CHW)
    prompt2 = prompt.reshape(1, CHW)
    mask2 = mask.reshape(1, CHW)

    sublane_mult = 8 * max(1, 4 // itemsize)       # f32 -> 8, bf16 -> 16
    bytes_per_image = CHW * itemsize
    tb = _pick_tile_batch(B, bytes_per_image, sublane_mult,
                          _vmem_tile_budget_bytes())
    grid = pl.cdiv(B, tb)

    # Exact (padding-free) VMEM accounting: double-buffered x/out tiles,
    # double-buffered (but DMA'd once) prompt + mask, plus margin.  Floor of
    # 16 MiB keeps v5e's small scoped default from biting.
    needed = (4 * tb * bytes_per_image          # x + out tiles, 2 buffers each
              + 4 * CHW * itemsize              # prompt + mask, 2 buffers each
              + (2 << 20))                      # margin
    vmem_limit = int(max(needed, 16 << 20))

    out2 = pl.pallas_call(
        _prompter_kernel,
        out_shape=jax.ShapeDtypeStruct((B, CHW), out_dtype),
        grid_spec=pltpu.PrefetchScalarGridSpec(
            num_scalar_prefetch=0,
            grid=(grid,),
            in_specs=[
                pl.BlockSpec((tb, CHW), lambda b: (b, 0)),   # x tile
                pl.BlockSpec((1, CHW), lambda b: (0, 0)),    # prompt (resident)
                pl.BlockSpec((1, CHW), lambda b: (0, 0)),    # mask (resident)
            ],
            out_specs=pl.BlockSpec((tb, CHW), lambda b: (b, 0)),
        ),
        compiler_params=pltpu.CompilerParams(
            dimension_semantics=("parallel",),
            vmem_limit_bytes=vmem_limit),
    )(x2, prompt2, mask2)

    return out2.reshape(B, C, H, W)


# --------------------------------------------------------------------------
# Pure-JAX reference mirroring the PyTorch forward exactly.
# --------------------------------------------------------------------------
def reference(x, pad_left, pad_right, pad_up, pad_down, *, pad_size):
    B = x.shape[0]
    inner = x.shape[2] - 2 * pad_size
    prompt = build_prompt(pad_left, pad_right, pad_up, pad_down, inner)
    prompt = jnp.tile(prompt, (B, 1, 1, 1)).astype(x.dtype)
    return prompt.at[:, :, pad_size:pad_size + inner,
                     pad_size:pad_size + inner].set(
        x[:, :, pad_size:pad_size + inner, pad_size:pad_size + inner])


if __name__ == "__main__":
    # Small, module-consistent shapes.
    batch = 8
    image_size = 16
    pad_size = 4
    inner_size = image_size - 2 * pad_size  # 8

    key = jax.random.PRNGKey(0)
    kx, kl, kr, ku, kd = jax.random.split(key, 5)

    x = jax.random.normal(kx, (batch, 3, image_size, image_size), jnp.float32)
    pad_left = jax.random.normal(kl, (1, 3, inner_size, pad_size), jnp.float32)
    pad_right = jax.random.normal(kr, (1, 3, inner_size, pad_size), jnp.float32)
    pad_up = jax.random.normal(ku, (1, 3, pad_size, image_size), jnp.float32)
    pad_down = jax.random.normal(kd, (1, 3, pad_size, image_size), jnp.float32)

    out = random_performance_prompter(
        x, pad_left, pad_right, pad_up, pad_down, pad_size=pad_size)
    out = jax.block_until_ready(out)

    ref = reference(x, pad_left, pad_right, pad_up, pad_down,
                    pad_size=pad_size)
    assert out.shape == (batch, 3, image_size, image_size)
    assert out.dtype == ref.dtype
    assert jnp.allclose(out, ref, atol=1e-6), "mismatch vs reference"

    print("KERNEL_OK")
</pallas_src>

<mosaic_0001>
module attributes {stable_mosaic.version = 11 : i64} {
  func.func @_prompter_kernel(%arg0: i32, %arg1: memref<8x768xf32, #tpu.memory_space<vmem>>, %arg2: memref<1x768xf32, #tpu.memory_space<vmem>>, %arg3: memref<1x768xf32, #tpu.memory_space<vmem>>, %arg4: memref<8x768xf32, #tpu.memory_space<vmem>>) attributes {dimension_semantics = [#tpu.dimension_semantics<parallel>], iteration_bounds = array<i64: 1>, scalar_prefetch = 0 : i64, scratch_operands = 0 : i64, tpu.core_type = #tpu.core_type<tc>, window_params = [{transform_indices = @transform_0, window_bounds = array<i64: 8, 768>}, {pipeline_mode = #tpu.pipeline_mode<synchronous>, transform_indices = @transform_1, window_bounds = array<i64: 1, 768>}, {pipeline_mode = #tpu.pipeline_mode<synchronous>, transform_indices = @transform_2, window_bounds = array<i64: 1, 768>}, {transform_indices = @transform_3, window_bounds = array<i64: 8, 768>}]} {
    %c0 = arith.constant 0 : index
    %c0_0 = arith.constant 0 : index
    %0 = vector.load %arg3[%c0, %c0_0] : memref<1x768xf32, #tpu.memory_space<vmem>>, vector<1x768xf32>
    %cst = arith.constant 0.000000e+00 : f32
    %1 = vector.broadcast %cst : f32 to vector<1x768xf32>
    %2 = arith.cmpf one, %0, %1 : vector<1x768xf32>
    %c0_1 = arith.constant 0 : index
    %c0_2 = arith.constant 0 : index
    %3 = vector.load %arg1[%c0_1, %c0_2] : memref<8x768xf32, #tpu.memory_space<vmem>>, vector<8x768xf32>
    %c0_3 = arith.constant 0 : index
    %c0_4 = arith.constant 0 : index
    %4 = vector.load %arg2[%c0_3, %c0_4] : memref<1x768xf32, #tpu.memory_space<vmem>>, vector<1x768xf32>
    %5 = vector.shape_cast %2 : vector<1x768xi1> to vector<1x768xi1>
    %6 = vector.broadcast %5 : vector<1x768xi1> to vector<8x768xi1>
    %7 = vector.shape_cast %4 : vector<1x768xf32> to vector<1x768xf32>
    %8 = vector.broadcast %7 : vector<1x768xf32> to vector<8x768xf32>
    %9 = arith.select %6, %3, %8 : vector<8x768xi1>, vector<8x768xf32>
    %c0_5 = arith.constant 0 : index
    %c0_6 = arith.constant 0 : index
    %10 = vector.load %arg4[%c0_5, %c0_6] : memref<8x768xf32, #tpu.memory_space<vmem>>, vector<8x768xf32>
    tpu.vector_store %arg4[%c0_5, %c0_6], %9 {strides = array<i32>} : memref<8x768xf32, #tpu.memory_space<vmem>>, vector<8x768xf32>,
    return
  }
  func.func @transform_0(%arg0: i32) -> (i32, i32) {
    %c0_i32 = arith.constant 0 : i32
    %c0_i32_0 = arith.constant 0 : i32
    return %arg0, %c0_i32 : i32, i32
  }
  func.func @transform_1(%arg0: i32) -> (i32, i32) {
    %c0_i32 = arith.constant 0 : i32
    %c0_i32_0 = arith.constant 0 : i32
    %c0_i32_1 = arith.constant 0 : i32
    return %c0_i32, %c0_i32_0 : i32, i32
  }
  func.func @transform_2(%arg0: i32) -> (i32, i32) {
    %c0_i32 = arith.constant 0 : i32
    %c0_i32_0 = arith.constant 0 : i32
    %c0_i32_1 = arith.constant 0 : i32
    return %c0_i32, %c0_i32_0 : i32, i32
  }
  func.func @transform_3(%arg0: i32) -> (i32, i32) {
    %c0_i32 = arith.constant 0 : i32
    %c0_i32_0 = arith.constant 0 : i32
    return %arg0, %c0_i32 : i32, i32
  }
}

</mosaic_0001>

<llo_original>
// kernel: tpu_custom_call.1
$region0: #{tpu_custom_call.1}
  #allocation0 [shape = 'u32[]', space=smem, size = 0x4, offset = 0x4, fixed_abs, tag = 'smem constant byte address 0x4 - core index']
  #allocation1 [shape = 'u32[72,128]{1,0:T(1,128)}', space=vmem, size = 0x9000, scoped, tag = 'internal scratch']
  %s0 = inlined_call_operand.hbm [shape: f32[8,768], index: 0, kind: input, shape index: {}]
  %s1 = inlined_call_operand.hbm [shape: f32[1,768], index: 1, kind: input, shape index: {}]
  %s2 = inlined_call_operand.hbm [shape: f32[1,768], index: 2, kind: input, shape index: {}]
  %s3 = inlined_call_operand.hbm [shape: f32[8,768], index: 3, kind: output, shape index: {}]
  %s4 = sld [smem:[#allocation0]]
  $region34: #{tpu_custom_call.1} parent=0
    _
  %s6 = ssub.s32 1, %s4
  %s7 = scalar_select 0, %s6, %s4
  $region1: #{tpu_custom_call.1} parent=0
    #allocation2 [shape = 'u8[24576]{0}', space=vmem, size = 0x6000, scoped, tag = 'input window, operand 0, single buffered']
    #allocation3 [shape = 's32[1]{0}', space=sflag, size = 0x4, scoped, tag = 'scoped memory for tpu_custom_call.1']
    #allocation4 [shape = 's32[1]{0}', space=sflag, size = 0x4, scoped, tag = 'scoped memory for tpu_custom_call.1']
    #allocation5 [shape = 'u8[3072]{0}', space=vmem, size = 0xc00, scoped, tag = 'input window, operand 1, single buffered']
    #allocation6 [shape = 's32[1]{0}', space=sflag, size = 0x4, scoped, tag = 'scoped memory for tpu_custom_call.1']
    #allocation7 [shape = 'u8[3072]{0}', space=vmem, size = 0xc00, scoped, tag = 'input window, operand 2, single buffered']
    #allocation8 [shape = 'u8[24576]{0}', space=vmem, size = 0x6000, scoped, tag = 'output window, operand 0, single buffered']
    %8 = vsyncpa [#allocation3], 0
    %9 = vsyncpa [#allocation6], 0
    %10 = vsyncpa [#allocation4], 0
    // Predicated region
    $region2: #{tpu_custom_call.1} parent=1 // pred_check
      _
    $region3: #{tpu_custom_call.1} parent=1 // pred_check_branch
      %12 = sbr.rel (0) target = $region5
    $region4: #{tpu_custom_call.1} parent=1 // pred_region
      %14 = vsyncadd [#allocation3], 0
      %s16 = sshll.u32 %s0, 4
      %s17 = int_to_ptr.hbm [resolvable:$true] %s16
      %s18 = sshll.u32 [#allocation2], 4
      %s19 = int_to_ptr.vmem [resolvable:$true] %s18
      %21 = dma.hbm_to_vmem [thread:$0]  %s17, 768, %s19, [#allocation3]
    $region5: #{tpu_custom_call.1} parent=1 // pred_fallthru
      _
    // Predicated region
    $region6: #{tpu_custom_call.1} parent=1 // pred_check
      _
    $region7: #{tpu_custom_call.1} parent=1 // pred_check_branch
      %23 = sbr.rel (0) target = $region9
    $region8: #{tpu_custom_call.1} parent=1 // pred_region
      %25 = vsyncadd [#allocation6], 0
      %s27 = sshll.u32 %s1, 4
      %s28 = int_to_ptr.hbm [resolvable:$true] %s27
      %s29 = sshll.u32 [#allocation5], 4
      %s30 = int_to_ptr.vmem [resolvable:$true] %s29
      %32 = dma.hbm_to_vmem [thread:$0]  %s28, 96, %s30, [#allocation6]
    $region9: #{tpu_custom_call.1} parent=1 // pred_fallthru
      _
    // Predicated region
    $region10: #{tpu_custom_call.1} parent=1 // pred_check
      _
    $region11: #{tpu_custom_call.1} parent=1 // pred_check_branch
      %34 = sbr.rel (0) target = $region13
    $region12: #{tpu_custom_call.1} parent=1 // pred_region
      %36 = vsyncadd [#allocation6], 0
      %s38 = sshll.u32 %s2, 4
      %s39 = int_to_ptr.hbm [resolvable:$true] %s38
      %s40 = sshll.u32 [#allocation7], 4
      %s41 = int_to_ptr.vmem [resolvable:$true] %s40
      %43 = dma.hbm_to_vmem [thread:$0]  %s39, 96, %s41, [#allocation6]
    $region13: #{tpu_custom_call.1} parent=1 // pred_fallthru
      _
    // Predicated region
    $region14: #{tpu_custom_call.1} parent=1 // pred_check
      _
    $region15: #{tpu_custom_call.1} parent=1 // pred_check_branch
      %45 = sbr.rel (0) target = $region17
    $region16: #{tpu_custom_call.1} parent=1 // pred_region
      %47 = dma.done [#allocation3], 768
    $region17: #{tpu_custom_call.1} parent=1 // pred_fallthru
      _
    // Predicated region
    $region18: #{tpu_custom_call.1} parent=1 // pred_check
      _
    $region19: #{tpu_custom_call.1} parent=1 // pred_check_branch
      %49 = sbr.rel (0) target = $region21
    $region20: #{tpu_custom_call.1} parent=1 // pred_region
      %51 = dma.done [#allocation6], 96
    $region21: #{tpu_custom_call.1} parent=1 // pred_fallthru
      _
    // Predicated region
    $region22: #{tpu_custom_call.1} parent=1 // pred_check
      _
    $region23: #{tpu_custom_call.1} parent=1 // pred_check_branch
      %53 = sbr.rel (0) target = $region25
    $region24: #{tpu_custom_call.1} parent=1 // pred_region
      %55 = dma.done [#allocation6], 96
    $region25: #{tpu_custom_call.1} parent=1 // pred_fallthru
      _
    %v56 = vld [vmem:[#allocation7] sm:$0x3f]
    %vm57 = vcmp.ne.f32.partialorder %v56, 0.0
    %v58 = vld [vmem:[#allocation2] sm:$0xff]
    %v59 = vld [vmem:[#allocation2 + $0x8] sm:$0xff]
    %v60 = vld [vmem:[#allocation2 + $0x10] sm:$0xff]
    %v61 = vld [vmem:[#allocation2 + $0x18] sm:$0xff]
    %v62 = vld [vmem:[#allocation2 + $0x20] sm:$0xff]
    %v63 = vld [vmem:[#allocation2 + $0x28] sm:$0xff]
    %v64 = vld [vmem:[#allocation5] sm:$0x3f]
    %v65 = vsel %vm57, 1, 0
    %v66 = vperm.slane %v65, 0
    %v67 = vperm.slane %v65, 1
    %v68 = vperm.slane %v65, 2
    %v69 = vperm.slane %v65, 3
    %v70 = vperm.slane %v65, 4
    %v71 = vperm.slane %v65, 5
    %vm72 = vcmp.eq.s32.totalorder %v66, 1
    %vm73 = vcmp.eq.s32.totalorder %v67, 1
    %vm74 = vcmp.eq.s32.totalorder %v68, 1
    %vm75 = vcmp.eq.s32.totalorder %v69, 1
    %vm76 = vcmp.eq.s32.totalorder %v70, 1
    %vm77 = vcmp.eq.s32.totalorder %v71, 1
    %v79 = vperm.slane %v64, 0
    %v80 = vperm.slane %v64, 1
    %v81 = vperm.slane %v64, 2
    %v82 = vperm.slane %v64, 3
    %v83 = vperm.slane %v64, 4
    %v84 = vperm.slane %v64, 5
    %v91 = vsel %vm72, %v58, %v79
    %v92 = vsel %vm73, %v59, %v80
    %v93 = vsel %vm74, %v60, %v81
    %v94 = vsel %vm75, %v61, %v82
    %v95 = vsel %vm76, %v62, %v83
    %v96 = vsel %vm77, %v63, %v84
    %97 = vst [vmem:[#allocation8] sm:$0xff] %v91
    %98 = vst [vmem:[#allocation8 + $0x8] sm:$0xff] %v92
    %99 = vst [vmem:[#allocation8 + $0x10] sm:$0xff] %v93
    %100 = vst [vmem:[#allocation8 + $0x18] sm:$0xff] %v94
    %101 = vst [vmem:[#allocation8 + $0x20] sm:$0xff] %v95
    %102 = vst [vmem:[#allocation8 + $0x28] sm:$0xff] %v96
    // Predicated region
    $region26: #{tpu_custom_call.1} parent=1 // pred_check
      _
    $region27: #{tpu_custom_call.1} parent=1 // pred_check_branch
      %104 = sbr.rel (0) target = $region29
    $region28: #{tpu_custom_call.1} parent=1 // pred_region
      %106 = vsyncadd [#allocation4], 0
      %s108 = sshll.u32 [#allocation8], 4
      %s109 = int_to_ptr.vmem [resolvable:$true] %s108
      %s110 = sshll.u32 %s3, 4
      %s111 = int_to_ptr.hbm [resolvable:$true] %s110
      %113 = dma.vmem_to_hbm [thread:$0]  %s109, 768, %s111, [#allocation4]
    $region29: #{tpu_custom_call.1} parent=1 // pred_fallthru
      _
    // Predicated region
    $region30: #{tpu_custom_call.1} parent=1 // pred_check
      _
    $region31: #{tpu_custom_call.1} parent=1 // pred_check_branch
      %115 = sbr.rel (0) target = $region33
    $region32: #{tpu_custom_call.1} parent=1 // pred_region
      %117 = dma.done [#allocation4], 768
    $region33: #{tpu_custom_call.1} parent=1 // pred_fallthru
      _
    %118 = vsyncpa [#allocation3], 1
    %119 = vsyncpa [#allocation6], 1
    %120 = vsyncpa [#allocation4], 1

</llo_original>
